<compile_context>
chip_gen: v5e
topology: v5e:2x2
jax: 0.10.0
libtpu: 0.0.40
codegen_flags: <defaults>
</compile_context>

<pallas_src>
import jax
import jax.numpy as jnp
from jax.experimental import pallas as pl
from jax.experimental.pallas import tpu as pltpu


def _round_up(n: int, m: int) -> int:
    return ((n + m - 1) // m) * m


def _choose_batch_tile(B: int, block_b: int) -> int:
    """Pick the batch tile.

    Big enough to amortize the ~0.35 us per-grid-step overhead, small enough
    that moderate B still yields >= 2 grid steps (v7x has 2 TensorCores that
    only help when the 'parallel' grid axis has length >= 2).
    """
    if B <= 8:
        return B  # full-dim block: exempt from the (8,128) block-shape rule
    # At least two grid steps; round to the f32 sublane granularity (8).
    return min(block_b, _round_up(pl.cdiv(B, 2), 8))


def _discriminator_kernel(x_ref, w1_ref, b1_ref, w2_ref, b2_ref, o_ref):
    # In-kernel f32 -> bf16 cast of the activation tile (no separate wrapper
    # cast pass over x; the convert hides under the MXU / DMA).
    x = x_ref[...].astype(w1_ref.dtype)

    # Layer 1: bf16 operands, f32 accumulation on the MXU.
    h = jnp.dot(x, w1_ref[...], preferred_element_type=jnp.float32)
    # Bias add + ReLU in f32 (VPU; v5e has no bf16 VPU path).
    h = jnp.maximum(h + b1_ref[...], 0.0)

    # Layer 2: cast the activation back to bf16 only as a matmul operand.
    z = jnp.dot(h.astype(w2_ref.dtype), w2_ref[...],
                preferred_element_type=jnp.float32)
    z = z + b2_ref[...]

    # Numerically stable sigmoid, exact reciprocal (per review: avoid approx
    # error near 0.5 and exp overflow for very negative z). exp rides the EUP.
    e = jnp.exp(-jnp.abs(z))
    inv = pl.reciprocal(1.0 + e, approx=False)
    o_ref[...] = jnp.where(z >= 0.0, inv, e * inv).astype(o_ref.dtype)


def discriminator_forward(x, w1, b1, w2, b2, *, block_b: int = 512):
    """x: (B, input_dim) f32; w1: (in, hid); b1: (1, hid); w2: (hid, out);
    b2: (1, out).  Returns sigmoid(relu(x@w1+b1)@w2+b2) as (B, output_dim) f32."""
    B, input_dim = x.shape
    hidden_dim = w1.shape[1]
    output_dim = w2.shape[1]

    # Lane-dense output: pad the (often tiny) output feature axis to 128 so
    # the in-kernel store is an unmasked vst; the wrapper slices it back.
    out_pad = _round_up(output_dim, 128)

    TB = _choose_batch_tile(B, block_b)
    grid = (pl.cdiv(B, TB),)  # ragged tail block is fine: rows are independent

    # One-time weight plumbing (weights are small & reused across all steps).
    w1_c = w1.astype(jnp.bfloat16)
    b1_c = b1.astype(jnp.float32).reshape(1, hidden_dim)
    w2_p = jnp.zeros((hidden_dim, out_pad), jnp.bfloat16).at[:, :output_dim].set(
        w2.astype(jnp.bfloat16))
    b2_p = jnp.zeros((1, out_pad), jnp.float32).at[:, :output_dim].set(
        b2.astype(jnp.float32).reshape(1, output_dim))

    # VMEM budget (bytes): resident weights/biases + double-buffered x / out
    # tiles + in-kernel intermediates.  Keep well clear of v7x's 64 MiB.
    resident = (input_dim * hidden_dim + hidden_dim * out_pad) * 2 \
        + (hidden_dim + out_pad) * 4
    per_step = 2 * TB * input_dim * 4 + 2 * TB * out_pad * 4
    scratch = TB * (input_dim + hidden_dim) * 2 + 2 * TB * hidden_dim * 4
    vmem_est = resident + per_step + scratch
    assert vmem_est < (56 << 20), (
        "weights + tiles too large to keep VMEM-resident on v7x (64 MiB); "
        "tile the hidden/K dimension instead")
    # TODO(synk): add a hidden/K-tiled fallback grid instead of asserting.
    vmem_limit = int(min(max(2 * vmem_est, 32 << 20), 60 << 20))

    out = pl.pallas_call(
        _discriminator_kernel,
        out_shape=jax.ShapeDtypeStruct((B, out_pad), jnp.float32),
        grid_spec=pl.GridSpec(
            grid=grid,
            in_specs=[
                # Activations: a new batch tile every grid step.
                pl.BlockSpec((TB, input_dim), lambda i: (i, 0)),
                # Weights / biases: same block every step -> VMEM-resident.
                pl.BlockSpec((input_dim, hidden_dim), lambda i: (0, 0)),
                pl.BlockSpec((1, hidden_dim), lambda i: (0, 0)),
                pl.BlockSpec((hidden_dim, out_pad), lambda i: (0, 0)),
                pl.BlockSpec((1, out_pad), lambda i: (0, 0)),
            ],
            out_specs=pl.BlockSpec((TB, out_pad), lambda i: (i, 0)),
        ),
        compiler_params=pltpu.CompilerParams(
            # Independent batch tiles: shardable across v7x's 2 TensorCores.
            dimension_semantics=("parallel",),
            vmem_limit_bytes=vmem_limit,
        ),
    )(x, w1_c, b1_c, w2_p, b2_p)

    # Strip the lane padding.  (A fused consumer could instead take the padded
    # buffer directly and avoid this extra pass.)
    if out_pad != output_dim:
        out = out[:, :output_dim]
    return out


def init_params(key, input_dim, hidden_dim, output_dim):
    """Deterministic init mimicking nn.Linear's U(-1/sqrt(fan_in), 1/sqrt(fan_in))."""
    k1, k2, k3, k4 = jax.random.split(key, 4)
    s1 = 1.0 / jnp.sqrt(jnp.float32(input_dim))
    s2 = 1.0 / jnp.sqrt(jnp.float32(hidden_dim))
    # Stored transposed relative to PyTorch: (in_features, out_features).
    w1 = jax.random.uniform(k1, (input_dim, hidden_dim), jnp.float32, -s1, s1)
    b1 = jax.random.uniform(k2, (1, hidden_dim), jnp.float32, -s1, s1)
    w2 = jax.random.uniform(k3, (hidden_dim, output_dim), jnp.float32, -s2, s2)
    b2 = jax.random.uniform(k4, (1, output_dim), jnp.float32, -s2, s2)
    return w1, b1, w2, b2


def _reference_bf16(x, w1, b1, w2, b2):
    """Pure-JAX reference matching the kernel's precision choices."""
    xb = x.astype(jnp.bfloat16).astype(jnp.float32)
    w1b = w1.astype(jnp.bfloat16).astype(jnp.float32)
    w2b = w2.astype(jnp.bfloat16).astype(jnp.float32)
    h = jnp.maximum(xb @ w1b + b1, 0.0)
    return jax.nn.sigmoid(h.astype(jnp.bfloat16).astype(jnp.float32) @ w2b + b2)


if __name__ == "__main__":
    # Small shapes consistent with the module's forward: (batch, input_dim).
    batch, input_dim, hidden_dim, output_dim = 2, 16, 32, 8

    key = jax.random.PRNGKey(0)
    kx, kp = jax.random.split(key)
    x = jax.random.normal(kx, (batch, input_dim), jnp.float32)
    w1, b1, w2, b2 = init_params(kp, input_dim, hidden_dim, output_dim)

    out = jax.block_until_ready(discriminator_forward(x, w1, b1, w2, b2))
    assert out.shape == (batch, output_dim)

    # Reference matching the kernel's precision (bf16 operands, f32 accum/epilogue).
    ref_bf16 = _reference_bf16(x, w1, b1, w2, b2)
    assert jnp.allclose(out, ref_bf16, atol=5e-3, rtol=5e-3)

    # Loose sanity check against the pure-f32 PyTorch-equivalent forward.
    ref_f32 = jax.nn.sigmoid(jnp.maximum(x @ w1 + b1, 0.0) @ w2 + b2)
    assert jnp.allclose(out, ref_f32, atol=3e-2, rtol=3e-2)

    # Exercise the multi-step grid + ragged tail path (TB=56, grid=2 for B=100).
    x2 = jax.random.normal(jax.random.PRNGKey(1), (100, input_dim), jnp.float32)
    out2 = jax.block_until_ready(discriminator_forward(x2, w1, b1, w2, b2))
    assert out2.shape == (100, output_dim)
    assert jnp.allclose(out2, _reference_bf16(x2, w1, b1, w2, b2),
                        atol=5e-3, rtol=5e-3)

    print("KERNEL_OK")
</pallas_src>

<mosaic_0001>
module attributes {stable_mosaic.version = 11 : i64} {
  func.func @_discriminator_kernel(%arg0: i32, %arg1: memref<2x16xf32, #tpu.memory_space<vmem>>, %arg2: memref<16x32xbf16, #tpu.memory_space<vmem>>, %arg3: memref<1x32xf32, #tpu.memory_space<vmem>>, %arg4: memref<32x128xbf16, #tpu.memory_space<vmem>>, %arg5: memref<1x128xf32, #tpu.memory_space<vmem>>, %arg6: memref<2x128xf32, #tpu.memory_space<vmem>>) attributes {dimension_semantics = [#tpu.dimension_semantics<parallel>], iteration_bounds = array<i64: 1>, scalar_prefetch = 0 : i64, scratch_operands = 0 : i64, tpu.core_type = #tpu.core_type<tc>, window_params = [{transform_indices = @transform_0, window_bounds = array<i64: 2, 16>}, {pipeline_mode = #tpu.pipeline_mode<synchronous>, transform_indices = @transform_1, window_bounds = array<i64: 16, 32>}, {pipeline_mode = #tpu.pipeline_mode<synchronous>, transform_indices = @transform_2, window_bounds = array<i64: 1, 32>}, {pipeline_mode = #tpu.pipeline_mode<synchronous>, transform_indices = @transform_3, window_bounds = array<i64: 32, 128>}, {pipeline_mode = #tpu.pipeline_mode<synchronous>, transform_indices = @transform_4, window_bounds = array<i64: 1, 128>}, {transform_indices = @transform_5, window_bounds = array<i64: 2, 128>}]} {
    %c0 = arith.constant 0 : index
    %c0_0 = arith.constant 0 : index
    %0 = vector.load %arg1[%c0, %c0_0] : memref<2x16xf32, #tpu.memory_space<vmem>>, vector<2x16xf32>
    %1 = arith.truncf %0 : vector<2x16xf32> to vector<2x16xbf16>
    %c0_1 = arith.constant 0 : index
    %c0_2 = arith.constant 0 : index
    %2 = vector.load %arg2[%c0_1, %c0_2] : memref<16x32xbf16, #tpu.memory_space<vmem>>, vector<16x32xbf16>
    %cst = arith.constant dense<0.000000e+00> : vector<2x32xf32>
    %3 = tpu.matmul %1, %2, %cst {dimension_numbers = #tpu.dot_dimension_numbers<[1], [0], [0], [1], [0, 0, 1, 1], [], []>} : vector<2x16xbf16>, vector<16x32xbf16>, vector<2x32xf32> -> vector<2x32xf32>
    %c0_3 = arith.constant 0 : index
    %c0_4 = arith.constant 0 : index
    %4 = vector.load %arg3[%c0_3, %c0_4] : memref<1x32xf32, #tpu.memory_space<vmem>>, vector<1x32xf32>
    %5 = vector.broadcast %4 : vector<1x32xf32> to vector<2x32xf32>
    %6 = arith.addf %3, %5 : vector<2x32xf32>
    %cst_5 = arith.constant 0.000000e+00 : f32
    %7 = vector.broadcast %cst_5 : f32 to vector<2x32xf32>
    %8 = arith.maximumf %6, %7 : vector<2x32xf32>
    %9 = arith.truncf %8 : vector<2x32xf32> to vector<2x32xbf16>
    %c0_6 = arith.constant 0 : index
    %c0_7 = arith.constant 0 : index
    %10 = vector.load %arg4[%c0_6, %c0_7] : memref<32x128xbf16, #tpu.memory_space<vmem>>, vector<32x128xbf16>
    %cst_8 = arith.constant dense<0.000000e+00> : vector<2x128xf32>
    %11 = tpu.matmul %9, %10, %cst_8 {dimension_numbers = #tpu.dot_dimension_numbers<[1], [0], [0], [1], [0, 0, 1, 1], [], []>} : vector<2x32xbf16>, vector<32x128xbf16>, vector<2x128xf32> -> vector<2x128xf32>
    %c0_9 = arith.constant 0 : index
    %c0_10 = arith.constant 0 : index
    %12 = vector.load %arg5[%c0_9, %c0_10] : memref<1x128xf32, #tpu.memory_space<vmem>>, vector<1x128xf32>
    %13 = vector.broadcast %12 : vector<1x128xf32> to vector<2x128xf32>
    %14 = arith.addf %11, %13 : vector<2x128xf32>
    %15 = math.absf %14 : vector<2x128xf32>
    %cst_11 = arith.constant 0.000000e+00 : f32
    %16 = vector.broadcast %cst_11 : f32 to vector<2x128xf32>
    %17 = arith.subf %16, %15 : vector<2x128xf32>
    %18 = math.exp %17 : vector<2x128xf32>
    %cst_12 = arith.constant 1.000000e+00 : f32
    %19 = vector.broadcast %cst_12 : f32 to vector<2x128xf32>
    %20 = arith.addf %19, %18 : vector<2x128xf32>
    %21 = tpu.reciprocal %20 : vector<2x128xf32> -> vector<2x128xf32>
    %cst_13 = arith.constant 0.000000e+00 : f32
    %22 = vector.broadcast %cst_13 : f32 to vector<2x128xf32>
    %23 = arith.cmpf oge, %14, %22 : vector<2x128xf32>
    %24 = arith.mulf %18, %21 : vector<2x128xf32>
    %25 = arith.select %23, %21, %24 : vector<2x128xi1>, vector<2x128xf32>
    %c0_14 = arith.constant 0 : index
    %c0_15 = arith.constant 0 : index
    %26 = vector.load %arg6[%c0_14, %c0_15] : memref<2x128xf32, #tpu.memory_space<vmem>>, vector<2x128xf32>
    tpu.vector_store %arg6[%c0_14, %c0_15], %25 {strides = array<i32>} : memref<2x128xf32, #tpu.memory_space<vmem>>, vector<2x128xf32>,
    return
  }
  func.func @transform_0(%arg0: i32) -> (i32, i32) {
    %c0_i32 = arith.constant 0 : i32
    %c0_i32_0 = arith.constant 0 : i32
    return %arg0, %c0_i32 : i32, i32
  }
  func.func @transform_1(%arg0: i32) -> (i32, i32) {
    %c0_i32 = arith.constant 0 : i32
    %c0_i32_0 = arith.constant 0 : i32
    %c0_i32_1 = arith.constant 0 : i32
    return %c0_i32, %c0_i32_0 : i32, i32
  }
  func.func @transform_2(%arg0: i32) -> (i32, i32) {
    %c0_i32 = arith.constant 0 : i32
    %c0_i32_0 = arith.constant 0 : i32
    %c0_i32_1 = arith.constant 0 : i32
    return %c0_i32, %c0_i32_0 : i32, i32
  }
  func.func @transform_3(%arg0: i32) -> (i32, i32) {
    %c0_i32 = arith.constant 0 : i32
    %c0_i32_0 = arith.constant 0 : i32
    %c0_i32_1 = arith.constant 0 : i32
    return %c0_i32, %c0_i32_0 : i32, i32
  }
  func.func @transform_4(%arg0: i32) -> (i32, i32) {
    %c0_i32 = arith.constant 0 : i32
    %c0_i32_0 = arith.constant 0 : i32
    %c0_i32_1 = arith.constant 0 : i32
    return %c0_i32, %c0_i32_0 : i32, i32
  }
  func.func @transform_5(%arg0: i32) -> (i32, i32) {
    %c0_i32 = arith.constant 0 : i32
    %c0_i32_0 = arith.constant 0 : i32
    return %arg0, %c0_i32 : i32, i32
  }
}

</mosaic_0001>

<llo_original>
// kernel: tpu_custom_call.1
$region0: #{tpu_custom_call.1}
  #allocation0 [shape = 'u32[]', space=smem, size = 0x4, offset = 0x4, fixed_abs, tag = 'smem constant byte address 0x4 - core index']
  #allocation1 [shape = 'u32[72,128]{1,0:T(1,128)}', space=vmem, size = 0x9000, scoped, tag = 'internal scratch']
  %s0 = inlined_call_operand.hbm [shape: f32[2,16], index: 0, kind: input, shape index: {}]
  %s1 = inlined_call_operand.hbm [shape: bf16[16,32], index: 1, kind: input, shape index: {}]
  %s2 = inlined_call_operand.vmem [shape: f32[1,32], index: 2, kind: input, shape index: {}]
  %s3 = inlined_call_operand.hbm [shape: bf16[32,128], index: 3, kind: input, shape index: {}]
  %s4 = inlined_call_operand.vmem [shape: f32[1,128], index: 4, kind: input, shape index: {}]
  %s5 = inlined_call_operand.hbm [shape: f32[2,128], index: 5, kind: output, shape index: {}]
  %s6 = sld [smem:[#allocation0]]
  $region42: #{tpu_custom_call.1} parent=0
    _
  %s8 = ssub.s32 1, %s6
  %s9 = scalar_select 0, %s8, %s6
  $region1: #{tpu_custom_call.1} parent=0
    #allocation2 [shape = 'u8[1024]{0}', space=vmem, size = 0x400, scoped, tag = 'input window, operand 0, single buffered']
    #allocation3 [shape = 's32[1]{0}', space=sflag, size = 0x4, scoped, tag = 'scoped memory for tpu_custom_call.1']
    #allocation4 [shape = 's32[1]{0}', space=sflag, size = 0x4, scoped, tag = 'scoped memory for tpu_custom_call.1']
    #allocation5 [shape = 'u8[4096]{0}', space=vmem, size = 0x1000, scoped, tag = 'input window, operand 1, single buffered']
    #allocation6 [shape = 's32[1]{0}', space=sflag, size = 0x4, scoped, tag = 'scoped memory for tpu_custom_call.1']
    #allocation7 [shape = 'u8[8192]{0}', space=vmem, size = 0x2000, scoped, tag = 'input window, operand 3, single buffered']
    #allocation8 [shape = 'u8[1024]{0}', space=vmem, size = 0x400, scoped, tag = 'output window, operand 0, single buffered']
    %10 = vsyncpa [#allocation3], 0
    %11 = vsyncpa [#allocation6], 0
    %12 = vsyncpa [#allocation4], 0
    // Predicated region
    $region2: #{tpu_custom_call.1} parent=1 // pred_check
      _
    $region3: #{tpu_custom_call.1} parent=1 // pred_check_branch
      %14 = sbr.rel (0) target = $region5
    $region4: #{tpu_custom_call.1} parent=1 // pred_region
      %16 = vsyncadd [#allocation3], 0
      %s18 = sshll.u32 %s0, 4
      %s19 = int_to_ptr.hbm [resolvable:$true] %s18
      %s20 = sshll.u32 [#allocation2], 4
      %s21 = int_to_ptr.vmem [resolvable:$true] %s20
      %23 = dma.hbm_to_vmem [thread:$0]  %s19, 32, %s21, [#allocation3]
    $region5: #{tpu_custom_call.1} parent=1 // pred_fallthru
      _
    // Predicated region
    $region6: #{tpu_custom_call.1} parent=1 // pred_check
      _
    $region7: #{tpu_custom_call.1} parent=1 // pred_check_branch
      %25 = sbr.rel (0) target = $region9
    $region8: #{tpu_custom_call.1} parent=1 // pred_region
      %27 = vsyncadd [#allocation6], 0
      %s28 = sshll.u32 %s1, 4
      %s29 = int_to_ptr.hbm [resolvable:$true] %s28
      %s30 = sshll.u32 [#allocation5], 4
      %s31 = int_to_ptr.vmem [resolvable:$true] %s30
      %36 = dma.hbm_to_vmem [thread:$0]  %s29, 128, %s31, [#allocation6], 64, 64, 4
    $region9: #{tpu_custom_call.1} parent=1 // pred_fallthru
      _
    // Predicated region
    $region10: #{tpu_custom_call.1} parent=1 // pred_check
      _
    $region11: #{tpu_custom_call.1} parent=1 // pred_check_branch
      %38 = sbr.rel (0) target = $region13
    $region12: #{tpu_custom_call.1} parent=1 // pred_region
      _
    $region13: #{tpu_custom_call.1} parent=1 // pred_fallthru
      _
    // Predicated region
    $region14: #{tpu_custom_call.1} parent=1 // pred_check
      _
    $region15: #{tpu_custom_call.1} parent=1 // pred_check_branch
      %40 = sbr.rel (0) target = $region17
    $region16: #{tpu_custom_call.1} parent=1 // pred_region
      %42 = vsyncadd [#allocation6], 0
      %s43 = sshll.u32 %s3, 4
      %s44 = int_to_ptr.hbm [resolvable:$true] %s43
      %s45 = sshll.u32 [#allocation7], 4
      %s46 = int_to_ptr.vmem [resolvable:$true] %s45
      %51 = dma.hbm_to_vmem [thread:$0]  %s44, 256, %s46, [#allocation6], 64, 64, 4
    $region17: #{tpu_custom_call.1} parent=1 // pred_fallthru
      _
    // Predicated region
    $region18: #{tpu_custom_call.1} parent=1 // pred_check
      _
    $region19: #{tpu_custom_call.1} parent=1 // pred_check_branch
      %53 = sbr.rel (0) target = $region21
    $region20: #{tpu_custom_call.1} parent=1 // pred_region
      _
    $region21: #{tpu_custom_call.1} parent=1 // pred_fallthru
      _
    // Predicated region
    $region22: #{tpu_custom_call.1} parent=1 // pred_check
      _
    $region23: #{tpu_custom_call.1} parent=1 // pred_check_branch
      %55 = sbr.rel (0) target = $region25
    $region24: #{tpu_custom_call.1} parent=1 // pred_region
      %57 = dma.done [#allocation3], 32
    $region25: #{tpu_custom_call.1} parent=1 // pred_fallthru
      _
    // Predicated region
    $region26: #{tpu_custom_call.1} parent=1 // pred_check
      _
    $region27: #{tpu_custom_call.1} parent=1 // pred_check_branch
      %59 = sbr.rel (0) target = $region29
    $region28: #{tpu_custom_call.1} parent=1 // pred_region
      %61 = dma.done [#allocation6], 128
    $region29: #{tpu_custom_call.1} parent=1 // pred_fallthru
      _
    // Predicated region
    $region30: #{tpu_custom_call.1} parent=1 // pred_check
      _
    $region31: #{tpu_custom_call.1} parent=1 // pred_check_branch
      %63 = sbr.rel (0) target = $region33
    $region32: #{tpu_custom_call.1} parent=1 // pred_region
      %65 = dma.done [#allocation6], 256
    $region33: #{tpu_custom_call.1} parent=1 // pred_fallthru
      _
    %v67 = vld [vmem:[#allocation2] sm:$0x3]
    %v68 = vpack.c.bf16 %v67, %v67
    %v69 = vld [vmem:[#allocation5] sm:$0xf]
    %v70 = vld [vmem:[#allocation5 + $0x4] sm:$0xf]
    %v71 = vld [vmem:[%s2] sm:$0x1]
    %v73 = vperm.slane %v71, 0
    %v77 = vunpack.c.l.b16 %v69
    %v78 = vunpack.c.l.b16 %v70
    %v79 = vpack.c.b16 %v78, %v77
    %vm81 = vcmask 130048
    %v83 = vsel %vm81, %v68, 0
    %85 = vmatpush.bf16.msra.mxu0 0
    %86 = vmatpush.bf16.msra.mxu0 0
    %87 = vmatpush.bf16.msra.mxu0 0
    %88 = vmatpush.bf16.msra.mxu0 0
    %89 = vmatpush.bf16.msra.mxu0 0
    %90 = vmatpush.bf16.msra.mxu0 0
    %91 = vmatpush.bf16.msra.mxu0 0
    %92 = vmatpush.bf16.msra.mxu0 %v79
    %93 = vmatmul.bf16.gmra.mxu0 %v83
    %v94 = vpop.f32.mrf.mxu0
    %v95 = vadd.f32 %v73, %v94
    %v96 = vpop.f32.mrf.mxu0
    %97 = vdwg.mxu0
    %v98 = vmax.f32 %v95, 0.0
    %v99 = vpack.c.bf16 %v98, %v98
    %v100 = vld [vmem:[#allocation7] sm:$0xf]
    %v101 = vld [vmem:[#allocation7 + $0x4] sm:$0xf]
    %v102 = vld [vmem:[#allocation7 + $0x8] sm:$0xf]
    %v103 = vld [vmem:[#allocation7 + $0xc] sm:$0xf]
    %v104 = vld [vmem:[%s4] sm:$0x1]
    %v106 = vperm.slane %v104, 0
    %v112 = vunpack.c.l.b16 %v100
    %v113 = vunpack.c.l.b16 %v101
    %v114 = vunpack.c.l.b16 %v102
    %v115 = vunpack.c.l.b16 %v103
    %v116 = vpack.c.b16 %v113, %v112
    %v117 = vpack.c.b16 %v115, %v114
    %vm120 = vcmask 261120
    %v122 = vsel %vm120, %v99, 0
    %124 = vmatpush.bf16.msra.mxu0 0
    %125 = vmatpush.bf16.msra.mxu0 0
    %126 = vmatpush.bf16.msra.mxu0 0
    %127 = vmatpush.bf16.msra.mxu0 0
    %128 = vmatpush.bf16.msra.mxu0 0
    %129 = vmatpush.bf16.msra.mxu0 0
    %130 = vmatpush.bf16.msra.mxu0 %v117
    %131 = vmatpush.bf16.msra.mxu0 %v116
    %132 = vmatmul.bf16.gmra.mxu0 %v122
    %v133 = vpop.f32.mrf.mxu0
    %v134 = vadd.f32 %v106, %v133
    %v135 = vpop.f32.mrf.mxu0
    %136 = vdwg.mxu0
    %v137 = vand.u32 2147483647, %v134
    %v138 = vsub.f32 0.0, %v137
    %v139 = vmul.f32 %v138, 1.442695
    %v140 = vpow.pop %v139
    %v141 = vadd.f32 %v140, 1.0
    %v142 = vrcp.pop %v141
    %v143 = vmul.f32 %v141, %v142
    %v144 = vsub.f32 1.0, %v143
    %v145 = vmul.f32 %v142, %v144
    %v146 = vadd.f32 %v142, %v145
    %vm147 = vweird.f32 %v141
    %vm148 = vweird.f32 %v142
    %vm149 = vmor %vm147, %vm148
    %v150 = vsel %vm149, %v142, %v146
    %v151 = vand.u32 2147483647, %v141
    %vm152 = vcmp.eq.f32.partialorder %v151, 8.507059e+37
    %v153 = vand.u32 %v141, 2147483648
    %v154 = vor.u32 1.1754944e-38, %v153
    %v155 = vsel %vm152, %v154, %v150
    %vm156 = vcmp.ge.f32.partialorder %v134, 0.0
    %v157 = vmul.f32 %v140, %v155
    %v158 = vsel %vm156, %v155, %v157
    %159 = vst [vmem:[#allocation8] sm:$0x3] %v158
    // Predicated region
    $region34: #{tpu_custom_call.1} parent=1 // pred_check
      _
    $region35: #{tpu_custom_call.1} parent=1 // pred_check_branch
      %161 = sbr.rel (0) target = $region37
    $region36: #{tpu_custom_call.1} parent=1 // pred_region
      %163 = vsyncadd [#allocation4], 0
      %s165 = sshll.u32 [#allocation8], 4
      %s166 = int_to_ptr.vmem [resolvable:$true] %s165
      %s167 = sshll.u32 %s5, 4
      %s168 = int_to_ptr.hbm [resolvable:$true] %s167
      %170 = dma.vmem_to_hbm [thread:$0]  %s166, 32, %s168, [#allocation4]
    $region37: #{tpu_custom_call.1} parent=1 // pred_fallthru
      _
    // Predicated region
    $region38: #{tpu_custom_call.1} parent=1 // pred_check
      _
    $region39: #{tpu_custom_call.1} parent=1 // pred_check_branch
      %172 = sbr.rel (0) target = $region41
    $region40: #{tpu_custom_call.1} parent=1 // pred_region
      %174 = dma.done [#allocation4], 32
    $region41: #{tpu_custom_call.1} parent=1 // pred_fallthru
      _
    %175 = vsyncpa [#allocation3], 1
    %176 = vsyncpa [#allocation6], 1
    %177 = vsyncpa [#allocation4], 1

</llo_original>
